<compile_context>
chip_gen: v5e
topology: v5e:2x2
jax: 0.10.0
libtpu: 0.0.40
codegen_flags: <defaults>
</compile_context>

<pallas_src>
import numpy as np
import jax
import jax.numpy as jnp
from jax import lax
from jax.experimental import pallas as pl
from jax.experimental.pallas import tpu as pltpu


def _loss_kernel(logit_ref, label_ref, diag_ref, satt_ref, out_ref,
                 ce_acc, tr_acc, sa_acc):
    b = pl.program_id(1)

    @pl.when(b == 0)
    def _init():
        ce_acc[...] = jnp.zeros_like(ce_acc)
        tr_acc[...] = jnp.zeros_like(tr_acc)
        sa_acc[...] = jnp.zeros_like(sa_acc)

    # --- cross-entropy partial: per-row (lse - picked), elementwise accumulate
    logit = logit_ref[...].astype(jnp.float32)                       # (bb, C)
    m = jnp.max(logit, axis=1, keepdims=True)
    lse = m + jnp.log(jnp.sum(jnp.exp(logit - m), axis=1, keepdims=True))
    col = lax.broadcasted_iota(jnp.int32, logit.shape, 1)
    picked = jnp.sum(jnp.where(col == label_ref[...], logit, 0.0),
                     axis=1, keepdims=True)                          # logit[i, label[i]]
    ce_acc[...] += lse - picked                                      # (bb, 1)

    # --- trace partial: diagonal already extracted in wrapper; keep lane axis
    tr_acc[...] += jnp.sum(diag_ref[...].astype(jnp.float32),
                           axis=0, keepdims=True)                    # (1, D)

    # --- s_att partial: lane-dense (bb, D*D) block, sublane-sum keeps lanes --
    sa_acc[...] += jnp.sum(satt_ref[...].astype(jnp.float32),
                           axis=0, keepdims=True)                    # (1, D*D)

    @pl.when(b == pl.num_programs(1) - 1)
    def _finalize():
        ce = jnp.sum(ce_acc[...])
        tr = jnp.sum(tr_acc[...])
        sa = jnp.sum(sa_acc[...])
        lane = lax.broadcasted_iota(jnp.int32, out_ref.shape, 2)
        out_ref[...] = jnp.where(lane == 0, ce,
                       jnp.where(lane == 1, tr,
                       jnp.where(lane == 2, sa, 0.0)))


def _choose_blocking(batch, row_bytes, gran, target_bytes=2 * 1024 * 1024):
    """Pick (num_core_blocks, batch_block): ~target_bytes of input per grid step."""
    if batch <= gran or batch % gran != 0:
        return 1, batch                                  # single full-batch block
    cap = max(gran, int(target_bytes // max(row_bytes, 1)))
    divisors = [d for d in range(gran, batch + 1, gran) if batch % d == 0]
    two_core = [d for d in divisors if d <= cap and (batch // d) % 2 == 0]
    if two_core:
        return 2, max(two_core)
    one_core = [d for d in divisors if d <= cap]
    return 1, (max(one_core) if one_core else gran)


def momn_loss(logit, feats, label, *, lw_lr, lw_sr):
    """Pallas forward of LOSS: returns (total_loss, cls_loss, aux_loss)."""
    x, s_att = feats[0], feats[1]
    B, C = logit.shape
    D = x.shape[2]
    DD = D * D

    # Layout plumbing (native dtypes, no f32 upcast in HBM):
    #   * only the diagonal of feats[0] is needed by the loss -> (B, D)
    #   * feats[1] flattened lane-dense -> (B, D*D)
    x_diag = jnp.diagonal(x, axis1=1, axis2=2)           # (B, D), native dtype
    s_flat = s_att.reshape(B, DD)                        # (B, D*D), native dtype
    label2d = label.reshape(B, 1).astype(jnp.int32)

    gran = {4: 8, 2: 16, 1: 32}.get(
        min(logit.dtype.itemsize, x.dtype.itemsize, s_att.dtype.itemsize), 8)
    row_bytes = (DD * s_att.dtype.itemsize + D * x.dtype.itemsize
                 + C * logit.dtype.itemsize + 4)
    nc, bb = _choose_blocking(B, row_bytes, gran)
    nbc = (B // bb) // nc                                # batch blocks per core

    def row_map(c, b):
        return (c * nbc + b, 0)

    partials = pl.pallas_call(
        _loss_kernel,
        out_shape=jax.ShapeDtypeStruct((nc, 8, 128), jnp.float32),
        grid=(nc, nbc),
        in_specs=[
            pl.BlockSpec((bb, C), row_map),              # logits (native dtype)
            pl.BlockSpec((bb, 1), row_map),              # labels (int32)
            pl.BlockSpec((bb, D), row_map),              # diag(feats[0])
            pl.BlockSpec((bb, DD), row_map),             # feats[1] lane-dense
        ],
        out_specs=pl.BlockSpec((1, 8, 128), lambda c, b: (c, 0, 0)),
        scratch_shapes=[
            pltpu.VMEM((bb, 1), jnp.float32),            # per-row CE partials
            pltpu.VMEM((1, D), jnp.float32),             # trace lane accumulator
            pltpu.VMEM((1, DD), jnp.float32),            # s_att lane accumulator
        ],
        compiler_params=pltpu.CompilerParams(
            dimension_semantics=("parallel", "arbitrary"),
            vmem_limit_bytes=32 * 1024 * 1024),
    )(logit, label2d, x_diag, s_flat)

    # Combine per-core partial sums (tiny scalar epilogue in XLA).
    ce_sum = jnp.sum(partials[:, 0, 0])
    tr_sum = jnp.sum(partials[:, 0, 1])
    sa_sum = jnp.sum(partials[:, 0, 2])

    cls_loss = ce_sum / B
    # `/ 256` is the literal constant in the PyTorch module (not dim-dependent)
    aux_loss = lw_lr * tr_sum / B / 256.0 + lw_sr * sa_sum / (B * DD)
    total_loss = cls_loss + aux_loss
    return total_loss, cls_loss, aux_loss


def momn_loss_ref(logit, feats, label, *, lw_lr, lw_sr):
    """Pure-JAX reference of the PyTorch LOSS.forward."""
    x, s_att = feats[0], feats[1]
    logp = jax.nn.log_softmax(logit.astype(jnp.float32), axis=-1)
    cls = -jnp.mean(jnp.take_along_axis(logp, label[:, None], axis=1))
    B = x.shape[0]
    tr = jnp.sum(jnp.trace(x.astype(jnp.float32), axis1=1, axis2=2))
    aux = lw_lr * tr / B / 256.0 + lw_sr * jnp.mean(s_att.astype(jnp.float32))
    return cls + aux, cls, aux


if __name__ == "__main__":
    # Shapes consistent with LOSS.forward: logit (B, num_cls),
    # feats[0] = x (B, dim, dim), feats[1] = s_att (B, dim, dim), label (B,)
    B, num_cls, D = 64, 10, 32
    lw_lr, lw_sr = 0.5, 0.5

    key = jax.random.PRNGKey(0)
    k1, k2, k3, k4 = jax.random.split(key, 4)

    logit = jax.random.normal(k1, (B, num_cls), jnp.float32)
    # Native bf16 feature tensors (kernel upcasts internally; wrapper does not).
    x = jax.random.normal(k2, (B, D, D), jnp.float32).astype(jnp.bfloat16)
    s_att = jax.nn.sigmoid(
        jax.random.normal(k3, (B, D, D), jnp.float32)).astype(jnp.bfloat16)
    label = jax.random.randint(k4, (B,), 0, num_cls, jnp.int32)

    total, cls, aux = momn_loss(logit, (x, s_att), label, lw_lr=lw_lr, lw_sr=lw_sr)
    jax.block_until_ready(total)

    total_r, cls_r, aux_r = momn_loss_ref(logit, (x, s_att), label,
                                          lw_lr=lw_lr, lw_sr=lw_sr)
    np.testing.assert_allclose(np.asarray(total), np.asarray(total_r),
                               rtol=2e-5, atol=2e-5)
    np.testing.assert_allclose(np.asarray(cls), np.asarray(cls_r),
                               rtol=2e-5, atol=2e-5)
    np.testing.assert_allclose(np.asarray(aux), np.asarray(aux_r),
                               rtol=2e-5, atol=2e-5)
    assert np.all(np.isfinite(np.asarray([float(total), float(cls), float(aux)])))
    print("KERNEL_OK")
</pallas_src>

<mosaic_0001>
module attributes {stable_mosaic.version = 11 : i64} {
  func.func @_loss_kernel(%arg0: i32, %arg1: i32, %arg2: memref<32x10xf32, #tpu.memory_space<vmem>>, %arg3: memref<32x1xi32, #tpu.memory_space<vmem>>, %arg4: memref<32x32xbf16, #tpu.memory_space<vmem>>, %arg5: memref<32x1024xbf16, #tpu.memory_space<vmem>>, %arg6: memref<1x8x128xf32, #tpu.memory_space<vmem>>, %arg7: memref<32x1xf32, #tpu.memory_space<vmem>>, %arg8: memref<1x32xf32, #tpu.memory_space<vmem>>, %arg9: memref<1x1024xf32, #tpu.memory_space<vmem>>) attributes {dimension_semantics = [#tpu.dimension_semantics<parallel>, #tpu.dimension_semantics<arbitrary>], iteration_bounds = array<i64: 2, 1>, scalar_prefetch = 0 : i64, scratch_operands = 3 : i64, tpu.core_type = #tpu.core_type<tc>, window_params = [{transform_indices = @transform_0, window_bounds = array<i64: 32, 10>}, {transform_indices = @transform_1, window_bounds = array<i64: 32, 1>}, {transform_indices = @transform_2, window_bounds = array<i64: 32, 32>}, {transform_indices = @transform_3, window_bounds = array<i64: 32, 1024>}, {transform_indices = @transform_4, window_bounds = array<i64: 1, 8, 128>}]} {
    %c0_i32 = arith.constant 0 : i32
    %0 = arith.cmpi eq, %arg1, %c0_i32 : i32
    %1 = arith.extui %0 : i1 to i32
    %c0_i32_0 = arith.constant 0 : i32
    %2 = arith.cmpi ne, %1, %c0_i32_0 : i32
    scf.if %2 {
      %cst_27 = arith.constant 0.000000e+00 : f32
      %42 = vector.broadcast %cst_27 : f32 to vector<32x1xf32>
      %c0_28 = arith.constant 0 : index
      %c0_29 = arith.constant 0 : index
      %43 = vector.load %arg7[%c0_28, %c0_29] : memref<32x1xf32, #tpu.memory_space<vmem>>, vector<32x1xf32>
      tpu.vector_store %arg7[%c0_28, %c0_29], %42 {strides = array<i32>} : memref<32x1xf32, #tpu.memory_space<vmem>>, vector<32x1xf32>,
      %cst_30 = arith.constant 0.000000e+00 : f32
      %44 = vector.broadcast %cst_30 : f32 to vector<1x32xf32>
      %c0_31 = arith.constant 0 : index
      %c0_32 = arith.constant 0 : index
      %45 = vector.load %arg8[%c0_31, %c0_32] : memref<1x32xf32, #tpu.memory_space<vmem>>, vector<1x32xf32>
      tpu.vector_store %arg8[%c0_31, %c0_32], %44 {strides = array<i32>} : memref<1x32xf32, #tpu.memory_space<vmem>>, vector<1x32xf32>,
      %cst_33 = arith.constant 0.000000e+00 : f32
      %46 = vector.broadcast %cst_33 : f32 to vector<1x1024xf32>
      %c0_34 = arith.constant 0 : index
      %c0_35 = arith.constant 0 : index
      %47 = vector.load %arg9[%c0_34, %c0_35] : memref<1x1024xf32, #tpu.memory_space<vmem>>, vector<1x1024xf32>
      tpu.vector_store %arg9[%c0_34, %c0_35], %46 {strides = array<i32>} : memref<1x1024xf32, #tpu.memory_space<vmem>>, vector<1x1024xf32>,
    } else {
    }
    %c0 = arith.constant 0 : index
    %c0_1 = arith.constant 0 : index
    %3 = vector.load %arg2[%c0, %c0_1] : memref<32x10xf32, #tpu.memory_space<vmem>>, vector<32x10xf32>
    %cst = arith.constant dense<0xFF800000> : vector<32xf32>
    %4 = vector.multi_reduction <maximumf>, %3, %cst [1] : vector<32x10xf32> to vector<32xf32>
    %5 = vector.shape_cast %4 : vector<32xf32> to vector<32x1xf32>
    %6 = vector.broadcast %5 : vector<32x1xf32> to vector<32x10xf32>
    %7 = arith.subf %3, %6 : vector<32x10xf32>
    %8 = math.exp %7 : vector<32x10xf32>
    %cst_2 = arith.constant dense<0.000000e+00> : vector<32xf32>
    %9 = vector.multi_reduction <add>, %8, %cst_2 [1] : vector<32x10xf32> to vector<32xf32>
    %10 = vector.shape_cast %9 : vector<32xf32> to vector<32x1xf32>
    %11 = math.log %10 : vector<32x1xf32>
    %12 = arith.addf %5, %11 : vector<32x1xf32>
    %13 = tpu.iota {dimensions = array<i32: 1>} : vector<32x10xi32>
    %c0_3 = arith.constant 0 : index
    %c0_4 = arith.constant 0 : index
    %14 = vector.load %arg3[%c0_3, %c0_4] : memref<32x1xi32, #tpu.memory_space<vmem>>, vector<32x1xi32>
    %15 = vector.broadcast %14 : vector<32x1xi32> to vector<32x10xi32>
    %16 = arith.cmpi eq, %13, %15 : vector<32x10xi32>
    %cst_5 = arith.constant 0.000000e+00 : f32
    %17 = vector.broadcast %cst_5 : f32 to vector<32x10xf32>
    %18 = arith.select %16, %3, %17 : vector<32x10xi1>, vector<32x10xf32>
    %cst_6 = arith.constant dense<0.000000e+00> : vector<32xf32>
    %19 = vector.multi_reduction <add>, %18, %cst_6 [1] : vector<32x10xf32> to vector<32xf32>
    %20 = vector.shape_cast %19 : vector<32xf32> to vector<32x1xf32>
    %c0_7 = arith.constant 0 : index
    %c0_8 = arith.constant 0 : index
    %21 = vector.load %arg7[%c0_7, %c0_8] : memref<32x1xf32, #tpu.memory_space<vmem>>, vector<32x1xf32>
    %22 = arith.subf %12, %20 : vector<32x1xf32>
    %23 = arith.addf %21, %22 : vector<32x1xf32>
    %c0_9 = arith.constant 0 : index
    %c0_10 = arith.constant 0 : index
    %24 = vector.load %arg7[%c0_9, %c0_10] : memref<32x1xf32, #tpu.memory_space<vmem>>, vector<32x1xf32>
    tpu.vector_store %arg7[%c0_9, %c0_10], %23 {strides = array<i32>} : memref<32x1xf32, #tpu.memory_space<vmem>>, vector<32x1xf32>,
    %c0_11 = arith.constant 0 : index
    %c0_12 = arith.constant 0 : index
    %25 = vector.load %arg8[%c0_11, %c0_12] : memref<1x32xf32, #tpu.memory_space<vmem>>, vector<1x32xf32>
    %c0_13 = arith.constant 0 : index
    %c0_14 = arith.constant 0 : index
    %26 = vector.load %arg4[%c0_13, %c0_14] : memref<32x32xbf16, #tpu.memory_space<vmem>>, vector<32x32xbf16>
    %27 = arith.extf %26 : vector<32x32xbf16> to vector<32x32xf32>
    %cst_15 = arith.constant dense<0.000000e+00> : vector<32xf32>
    %28 = vector.multi_reduction <add>, %27, %cst_15 [0] : vector<32x32xf32> to vector<32xf32>
    %29 = vector.shape_cast %28 : vector<32xf32> to vector<1x32xf32>
    %30 = arith.addf %25, %29 : vector<1x32xf32>
    %c0_16 = arith.constant 0 : index
    %c0_17 = arith.constant 0 : index
    %31 = vector.load %arg8[%c0_16, %c0_17] : memref<1x32xf32, #tpu.memory_space<vmem>>, vector<1x32xf32>
    tpu.vector_store %arg8[%c0_16, %c0_17], %30 {strides = array<i32>} : memref<1x32xf32, #tpu.memory_space<vmem>>, vector<1x32xf32>,
    %c0_18 = arith.constant 0 : index
    %c0_19 = arith.constant 0 : index
    %32 = vector.load %arg9[%c0_18, %c0_19] : memref<1x1024xf32, #tpu.memory_space<vmem>>, vector<1x1024xf32>
    %c0_20 = arith.constant 0 : index
    %c0_21 = arith.constant 0 : index
    %33 = vector.load %arg5[%c0_20, %c0_21] : memref<32x1024xbf16, #tpu.memory_space<vmem>>, vector<32x1024xbf16>
    %34 = arith.extf %33 : vector<32x1024xbf16> to vector<32x1024xf32>
    %cst_22 = arith.constant dense<0.000000e+00> : vector<1024xf32>
    %35 = vector.multi_reduction <add>, %34, %cst_22 [0] : vector<32x1024xf32> to vector<1024xf32>
    %36 = vector.shape_cast %35 : vector<1024xf32> to vector<1x1024xf32>
    %37 = arith.addf %32, %36 : vector<1x1024xf32>
    %c0_23 = arith.constant 0 : index
    %c0_24 = arith.constant 0 : index
    %38 = vector.load %arg9[%c0_23, %c0_24] : memref<1x1024xf32, #tpu.memory_space<vmem>>, vector<1x1024xf32>
    tpu.vector_store %arg9[%c0_23, %c0_24], %37 {strides = array<i32>} : memref<1x1024xf32, #tpu.memory_space<vmem>>, vector<1x1024xf32>,
    %c0_i32_25 = arith.constant 0 : i32
    %39 = arith.cmpi eq, %arg1, %c0_i32_25 : i32
    %40 = arith.extui %39 : i1 to i32
    %c0_i32_26 = arith.constant 0 : i32
    %41 = arith.cmpi ne, %40, %c0_i32_26 : i32
    scf.if %41 {
      %c0_27 = arith.constant 0 : index
      %c0_28 = arith.constant 0 : index
      %42 = vector.load %arg7[%c0_27, %c0_28] : memref<32x1xf32, #tpu.memory_space<vmem>>, vector<32x1xf32>
      %43 = vector.shape_cast %42 : vector<32x1xf32> to vector<1x32x1xf32>
      %cst_29 = arith.constant dense<0.000000e+00> : vector<1xf32>
      %44 = vector.multi_reduction <add>, %43, %cst_29 [1, 2] : vector<1x32x1xf32> to vector<1xf32>
      %45 = vector.shape_cast %44 : vector<1xf32> to vector<1x1x1xf32>
      %46 = vector.extract %45[0, 0, 0] : f32 from vector<1x1x1xf32>
      %c0_30 = arith.constant 0 : index
      %c0_31 = arith.constant 0 : index
      %47 = vector.load %arg8[%c0_30, %c0_31] : memref<1x32xf32, #tpu.memory_space<vmem>>, vector<1x32xf32>
      %48 = vector.shape_cast %47 : vector<1x32xf32> to vector<1x1x32xf32>
      %cst_32 = arith.constant dense<0.000000e+00> : vector<1xf32>
      %49 = vector.multi_reduction <add>, %48, %cst_32 [1, 2] : vector<1x1x32xf32> to vector<1xf32>
      %50 = vector.shape_cast %49 : vector<1xf32> to vector<1x1x1xf32>
      %51 = vector.extract %50[0, 0, 0] : f32 from vector<1x1x1xf32>
      %c0_33 = arith.constant 0 : index
      %c0_34 = arith.constant 0 : index
      %52 = vector.load %arg9[%c0_33, %c0_34] : memref<1x1024xf32, #tpu.memory_space<vmem>>, vector<1x1024xf32>
      %53 = vector.shape_cast %52 : vector<1x1024xf32> to vector<1x1x1024xf32>
      %cst_35 = arith.constant dense<0.000000e+00> : vector<1xf32>
      %54 = vector.multi_reduction <add>, %53, %cst_35 [1, 2] : vector<1x1x1024xf32> to vector<1xf32>
      %55 = vector.shape_cast %54 : vector<1xf32> to vector<1x1x1xf32>
      %56 = vector.extract %55[0, 0, 0] : f32 from vector<1x1x1xf32>
      %57 = tpu.iota {dimensions = array<i32: 2>} : vector<1x8x128xi32>
      %c0_i32_36 = arith.constant 0 : i32
      %58 = vector.broadcast %c0_i32_36 : i32 to vector<1x8x128xi32>
      %59 = arith.cmpi eq, %57, %58 : vector<1x8x128xi32>
      %c1_i32 = arith.constant 1 : i32
      %60 = vector.broadcast %c1_i32 : i32 to vector<1x8x128xi32>
      %61 = arith.cmpi eq, %57, %60 : vector<1x8x128xi32>
      %c2_i32 = arith.constant 2 : i32
      %62 = vector.broadcast %c2_i32 : i32 to vector<1x8x128xi32>
      %63 = arith.cmpi eq, %57, %62 : vector<1x8x128xi32>
      %cst_37 = arith.constant 0.000000e+00 : f32
      %64 = vector.broadcast %56 : f32 to vector<1x8x128xf32>
      %65 = vector.broadcast %cst_37 : f32 to vector<1x8x128xf32>
      %66 = arith.select %63, %64, %65 : vector<1x8x128xi1>, vector<1x8x128xf32>
      %67 = vector.broadcast %51 : f32 to vector<1x8x128xf32>
      %68 = arith.select %61, %67, %66 : vector<1x8x128xi1>, vector<1x8x128xf32>
      %69 = vector.broadcast %46 : f32 to vector<1x8x128xf32>
      %70 = arith.select %59, %69, %68 : vector<1x8x128xi1>, vector<1x8x128xf32>
      %c0_38 = arith.constant 0 : index
      %c0_39 = arith.constant 0 : index
      %c0_40 = arith.constant 0 : index
      %71 = vector.load %arg6[%c0_38, %c0_39, %c0_40] : memref<1x8x128xf32, #tpu.memory_space<vmem>>, vector<1x8x128xf32>
      tpu.vector_store %arg6[%c0_38, %c0_39, %c0_40], %70 {strides = array<i32>} : memref<1x8x128xf32, #tpu.memory_space<vmem>>, vector<1x8x128xf32>,
    } else {
    }
    return
  }
  func.func @transform_0(%arg0: i32, %arg1: i32) -> (i32, i32) {
    %c1_i32 = arith.constant 1 : i32
    %0 = arith.muli %arg0, %c1_i32 : i32
    %1 = arith.addi %0, %arg1 : i32
    %c0_i32 = arith.constant 0 : i32
    %c0_i32_0 = arith.constant 0 : i32
    return %1, %c0_i32 : i32, i32
  }
  func.func @transform_1(%arg0: i32, %arg1: i32) -> (i32, i32) {
    %c1_i32 = arith.constant 1 : i32
    %0 = arith.muli %arg0, %c1_i32 : i32
    %1 = arith.addi %0, %arg1 : i32
    %c0_i32 = arith.constant 0 : i32
    %c0_i32_0 = arith.constant 0 : i32
    return %1, %c0_i32 : i32, i32
  }
  func.func @transform_2(%arg0: i32, %arg1: i32) -> (i32, i32) {
    %c1_i32 = arith.constant 1 : i32
    %0 = arith.muli %arg0, %c1_i32 : i32
    %1 = arith.addi %0, %arg1 : i32
    %c0_i32 = arith.constant 0 : i32
    %c0_i32_0 = arith.constant 0 : i32
    return %1, %c0_i32 : i32, i32
  }
  func.func @transform_3(%arg0: i32, %arg1: i32) -> (i32, i32) {
    %c1_i32 = arith.constant 1 : i32
    %0 = arith.muli %arg0, %c1_i32 : i32
    %1 = arith.addi %0, %arg1 : i32
    %c0_i32 = arith.constant 0 : i32
    %c0_i32_0 = arith.constant 0 : i32
    return %1, %c0_i32 : i32, i32
  }
  func.func @transform_4(%arg0: i32, %arg1: i32) -> (i32, i32, i32) {
    %c0_i32 = arith.constant 0 : i32
    %c0_i32_0 = arith.constant 0 : i32
    %c0_i32_1 = arith.constant 0 : i32
    return %arg0, %c0_i32, %c0_i32_0 : i32, i32, i32
  }
}

</mosaic_0001>

<llo_original>
// kernel: tpu_custom_call.1
$region0: #{tpu_custom_call.1}
  #allocation0 [shape = 'u32[]', space=smem, size = 0x4, offset = 0x4, fixed_abs, tag = 'smem constant byte address 0x4 - core index']
  #allocation1 [shape = 'u32[72,128]{1,0:T(1,128)}', space=vmem, size = 0x9000, scoped, tag = 'internal scratch']
  #allocation2 [shape = 'f32[32,1]{1,0:T(8,128)}', space=vmem, size = 0x4000, scoped, tag = 'scratch operand']
  #allocation3 [shape = 'f32[1,32]{1,0:T(1,128)}', space=vmem, size = 0x200, scoped, tag = 'scratch operand']
  #allocation4 [shape = 'f32[1,1024]{1,0:T(1,128)}', space=vmem, size = 0x1000, scoped, tag = 'scratch operand']
  %s0 = inlined_call_operand.vmem [shape: f32[64,10], index: 0, kind: input, shape index: {}]
  %s1 = inlined_call_operand.vmem [shape: s32[64,1], index: 1, kind: input, shape index: {}]
  %s2 = inlined_call_operand.vmem [shape: bf16[64,32], index: 2, kind: input, shape index: {}]
  %s3 = inlined_call_operand.hbm [shape: bf16[64,1024], index: 3, kind: input, shape index: {}]
  %s4 = inlined_call_operand.hbm [shape: f32[2,8,128], index: 4, kind: output, shape index: {}]
  %s5 = sld [smem:[#allocation0]]
  $region61: #{tpu_custom_call.1} parent=0
    _
  %s7 = ssub.s32 1, %s5
  %s8 = scalar_select 0, %s7, %s5
  $region1: #{tpu_custom_call.1} parent=0
    #allocation5 [shape = 'u8[131072]{0}', space=vmem, size = 0x20000, scoped, tag = 'input window, operand 3']
    #allocation6 [shape = 's32[2]{0}', space=sflag, size = 0x8, scoped, tag = 'scoped memory for tpu_custom_call.1']
    #allocation7 [shape = 's32[2]{0}', space=sflag, size = 0x8, scoped, tag = 'scoped memory for tpu_custom_call.1']
    #allocation8 [shape = 'u8[8192]{0}', space=vmem, size = 0x2000, scoped, tag = 'output window, operand 0']
    %9 = vsyncpa [#allocation6], 0
    %s10 = scalar_lea.sflag [#allocation6], 1
    %11 = vsyncpa %s10, 0
    %12 = vsyncpa [#allocation7], 0
    %s13 = scalar_lea.sflag [#allocation7], 1
    %14 = vsyncpa %s13, 0
    loop: start=0, step=1, limit=4
    $region2: #{tpu_custom_call.1} parent=1 // loop_pre_header
      _
    $region3: #{tpu_custom_call.1} parent=1 // loop_header
      %s16 = sphi 0, %s20
      %p17 = scmp.ge.s32.totalorder %s16, 4
      %s23 = sphi 0, %s35
      %s24 = sphi 0, %s31
      %s25 = sphi 0, %s23
      %s26 = sphi 0, %s24
      %s27 = sphi 0, %s25
      %s28 = sphi 0, %s26
      %s40 = sphi 0, %s42
      %s43 = sphi 0, %s40
      %s44 = sphi 0, %s43
      %s60 = sphi 0, %s44
      %s68 = sphi 0, %s70
      %s71 = sphi 0, %s68
      %s72 = sphi 0, %s71
      %s88 = sphi 0, %s72
      %s96 = sphi 0, %s98
      %s99 = sphi 0, %s96
      %s100 = sphi 0, %s99
      %s116 = sphi 0, %s100
      %s124 = sphi 0, %s126
      %s127 = sphi 0, %s124
      %s128 = sphi 0, %s127
      %s144 = sphi 0, %s128
      %s150 = sphi 0, %s152
      %s153 = sphi 0, %s150
      %s154 = sphi 0, %s153
      %s170 = sphi 0, %s154
    $region4: #{tpu_custom_call.1} parent=1 // loop_header_branch
      %19 = sbr.rel (%p17) target = $region8
    $region5: #{tpu_custom_call.1} parent=1 // loop_body
      %s21 = ssub.s32 %s16, 1
      %s22 = ssub.s32 %s16, 2
      %s29 = sadd.s32 1, %s24
      %p30 = scmp.ge.s32.totalorder %s29, 1
      %s31 = scalar_select %p30, 0, %s29
      %s32 = sadd.s32 1, %s23
      %s33 = scalar_select %p30, %s32, %s23
      %p34 = scmp.ge.s32.totalorder %s33, 2
      %s35 = scalar_select %p34, 0, %s33
      %s36 = sadd.s32 %s23, %s24
      %s37 = sadd.s32 %s35, %s31
      %s38 = ssub.s32 %s36, %s37
      %p39 = scmp.eq.s32.totalorder %s38, 0
      %s41 = sadd.s32 %s40, 1
      %s42 = scalar_select %p39, %s40, %s41
      %p45 = pneg %p39
      %p46 = scmp.eq.s32.totalorder %s16, 1
      %p47 = por %p45, %p46
      %p48 = scmp.ne.s32.totalorder %s40, %s43
      %p49 = scmp.eq.s32.totalorder %s16, 0
      %p50 = por %p48, %p49
      %p51 = scmp.ne.s32.totalorder %s40, %s43
      %p52 = scmp.eq.s32.totalorder %s21, 1
      %p53 = por %p51, %p52
      %p54 = scmp.ne.s32.totalorder %s43, %s44
      %p55 = scmp.eq.s32.totalorder %s21, 0
      %p56 = por %p54, %p55
      %p57 = scmp.ne.s32.totalorder %s43, %s44
      %p58 = scmp.eq.s32.totalorder %s22, 1
      %p59 = por %p57, %p58
      %p61 = scmp.ne.s32.totalorder %s44, %s60
      %p62 = scmp.eq.s32.totalorder %s22, 0
      %p63 = por %p61, %p62
      %s64 = sadd.s32 %s23, %s24
      %s65 = sadd.s32 %s35, %s31
      %s66 = ssub.s32 %s64, %s65
      %p67 = scmp.eq.s32.totalorder %s66, 0
      %s69 = sadd.s32 %s68, 1
      %s70 = scalar_select %p67, %s68, %s69
      %p73 = pneg %p67
      %p74 = scmp.eq.s32.totalorder %s16, 1
      %p75 = por %p73, %p74
      %p76 = scmp.ne.s32.totalorder %s68, %s71
      %p77 = scmp.eq.s32.totalorder %s16, 0
      %p78 = por %p76, %p77
      %p79 = scmp.ne.s32.totalorder %s68, %s71
      %p80 = scmp.eq.s32.totalorder %s21, 1
      %p81 = por %p79, %p80
      %p82 = scmp.ne.s32.totalorder %s71, %s72
      %p83 = scmp.eq.s32.totalorder %s21, 0
      %p84 = por %p82, %p83
      %p85 = scmp.ne.s32.totalorder %s71, %s72
      %p86 = scmp.eq.s32.totalorder %s22, 1
      %p87 = por %p85, %p86
      %p89 = scmp.ne.s32.totalorder %s72, %s88
      %p90 = scmp.eq.s32.totalorder %s22, 0
      %p91 = por %p89, %p90
      %s92 = sadd.s32 %s23, %s24
      %s93 = sadd.s32 %s35, %s31
      %s94 = ssub.s32 %s92, %s93
      %p95 = scmp.eq.s32.totalorder %s94, 0
      %s97 = sadd.s32 %s96, 1
      %s98 = scalar_select %p95, %s96, %s97
      %p101 = pneg %p95
      %p102 = scmp.eq.s32.totalorder %s16, 1
      %p103 = por %p101, %p102
      %p104 = scmp.ne.s32.totalorder %s96, %s99
      %p105 = scmp.eq.s32.totalorder %s16, 0
      %p106 = por %p104, %p105
      %p107 = scmp.ne.s32.totalorder %s96, %s99
      %p108 = scmp.eq.s32.totalorder %s21, 1
      %p109 = por %p107, %p108
      %p110 = scmp.ne.s32.totalorder %s99, %s100
      %p111 = scmp.eq.s32.totalorder %s21, 0
      %p112 = por %p110, %p111
      %p113 = scmp.ne.s32.totalorder %s99, %s100
      %p114 = scmp.eq.s32.totalorder %s22, 1
      %p115 = por %p113, %p114
      %p117 = scmp.ne.s32.totalorder %s100, %s116
      %p118 = scmp.eq.s32.totalorder %s22, 0
      %p119 = por %p117, %p118
      %s120 = sadd.s32 %s23, %s24
      %s121 = sadd.s32 %s35, %s31
      %s122 = ssub.s32 %s120, %s121
      %p123 = scmp.eq.s32.totalorder %s122, 0
      %s125 = sadd.s32 %s124, 1
      %s126 = scalar_select %p123, %s124, %s125
      %p129 = pneg %p123
      %p130 = scmp.eq.s32.totalorder %s16, 1
      %p131 = por %p129, %p130
      %p132 = scmp.ne.s32.totalorder %s124, %s127
      %p133 = scmp.eq.s32.totalorder %s16, 0
      %p134 = por %p132, %p133
      %p135 = scmp.ne.s32.totalorder %s124, %s127
      %p136 = scmp.eq.s32.totalorder %s21, 1
      %p137 = por %p135, %p136
      %p138 = scmp.ne.s32.totalorder %s127, %s128
      %p139 = scmp.eq.s32.totalorder %s21, 0
      %p140 = por %p138, %p139
      %p141 = scmp.ne.s32.totalorder %s127, %s128
      %p142 = scmp.eq.s32.totalorder %s22, 1
      %p143 = por %p141, %p142
      %p145 = scmp.ne.s32.totalorder %s128, %s144
      %p146 = scmp.eq.s32.totalorder %s22, 0
      %p147 = por %p145, %p146
      %s148 = ssub.s32 %s23, %s35
      %p149 = scmp.eq.s32.totalorder %s148, 0
      %s151 = sadd.s32 %s150, 1
      %s152 = scalar_select %p149, %s150, %s151
      %p155 = pneg %p149
      %p156 = scmp.eq.s32.totalorder %s16, 1
      %p157 = por %p155, %p156
      %p158 = scmp.ne.s32.totalorder %s150, %s153
      %p159 = scmp.eq.s32.totalorder %s16, 0
      %p160 = por %p158, %p159
      %p161 = scmp.ne.s32.totalorder %s150, %s153
      %p162 = scmp.eq.s32.totalorder %s21, 1
      %p163 = por %p161, %p162
      %p164 = scmp.ne.s32.totalorder %s153, %s154
      %p165 = scmp.eq.s32.totalorder %s21, 0
      %p166 = por %p164, %p165
      %p167 = scmp.ne.s32.totalorder %s153, %s154
      %p168 = scmp.eq.s32.totalorder %s22, 1
      %p169 = por %p167, %p168
      %p171 = scmp.ne.s32.totalorder %s154, %s170
      %p172 = scmp.eq.s32.totalorder %s22, 0
      %p173 = por %p171, %p172
      %p174 = scmp.le.s32.totalorder 1, %s16
      %p175 = scmp.lt.s32.totalorder %s16, 3
      %p176 = pnand %p174, %p175
      %p177 = pneg %p176
      // Predicated region
      $region9: #{tpu_custom_call.1} parent=5 // pred_check
        _
      $region10: #{tpu_custom_call.1} parent=5 // pred_check_branch
        %179 = sbr.rel (%p176) target = $region12
      $region11: #{tpu_custom_call.1} parent=5 // pred_region
        %s180 = ssub.s32 %s16, 1
      $region12: #{tpu_custom_call.1} parent=5 // pred_fallthru
        _
      %p181 = scmp.lt.s32.totalorder %s16, 2
      // Predicated region
      $region13: #{tpu_custom_call.1} parent=5 // pred_check
        %p182 = pneg %p181
      $region14: #{tpu_custom_call.1} parent=5 // pred_check_branch
        %184 = sbr.rel (%p182) target = $region16
      $region15: #{tpu_custom_call.1} parent=5 // pred_region
        // Predicated region
        $region17: #{tpu_custom_call.1} parent=15 // pred_check
          %p185 = pneg %p50
        $region18: #{tpu_custom_call.1} parent=15 // pred_check_branch
          %187 = sbr.rel (%p185) target = $region20
        $region19: #{tpu_custom_call.1} parent=15 // pred_region
          %s188 = sadd.s32 %s23, %s24
          %s189 = smul.u32 4, %s188
          %p190 = scmp.lt.s32.totalorder %s189, 7
          %s191 = scalar_select %p190, %s189, 7
          %s192 = smul.addr %s191, 8
          %s193 = scalar_lea.vmem %s0, %s192
          %s194 = sadd.s32 %s23, %s24
          %s195 = smul.u32 4, %s194
        $region20: #{tpu_custom_call.1} parent=15 // pred_fallthru
          _
        // Predicated region
        $region21: #{tpu_custom_call.1} parent=15 // pred_check
          %p196 = pneg %p78
        $region22: #{tpu_custom_call.1} parent=15 // pred_check_branch
          %198 = sbr.rel (%p196) target = $region24
        $region23: #{tpu_custom_call.1} parent=15 // pred_region
          %s199 = sadd.s32 %s23, %s24
          %s200 = smul.u32 4, %s199
          %p201 = scmp.lt.s32.totalorder %s200, 7
          %s202 = scalar_select %p201, %s200, 7
          %s203 = smul.addr %s202, 8
          %s204 = scalar_lea.vmem %s1, %s203
          %s205 = sadd.s32 %s23, %s24
          %s206 = smul.u32 4, %s205
        $region24: #{tpu_custom_call.1} parent=15 // pred_fallthru
          _
        // Predicated region
        $region25: #{tpu_custom_call.1} parent=15 // pred_check
          %p207 = pneg %p106
        $region26: #{tpu_custom_call.1} parent=15 // pred_check_branch
          %209 = sbr.rel (%p207) target = $region28
        $region27: #{tpu_custom_call.1} parent=15 // pred_region
          %s210 = sadd.s32 %s23, %s24
          %s211 = smul.u32 4, %s210
          %p212 = scmp.lt.s32.totalorder %s211, 7
          %s213 = scalar_select %p212, %s211, 7
          %s214 = smul.addr %s213, 4
          %s215 = scalar_lea.vmem %s2, %s214
          %s216 = sadd.s32 %s23, %s24
          %s217 = smul.u32 4, %s216
        $region28: #{tpu_custom_call.1} parent=15 // pred_fallthru
          _
        // Predicated region
        $region29: #{tpu_custom_call.1} parent=15 // pred_check
          %p218 = pneg %p134
        $region30: #{tpu_custom_call.1} parent=15 // pred_check_branch
          %220 = sbr.rel (%p218) target = $region32
        $region31: #{tpu_custom_call.1} parent=15 // pred_region
          %s221 = sand.u32 %s124, 1
          %s222 = scalar_lea.sflag [#allocation6], %s221
          %s223 = sand.u32 %s124, 1
          %s224 = smul.addr %s223, 128
          %s225 = scalar_lea.vmem [#allocation5], %s224
          %s226 = sadd.s32 %s23, %s24
          %s227 = smul.u32 4, %s226
          %229 = vsyncadd %s222, 0
          %s230 = smul.addr %s227, 8
          %s231 = smul.addr %s230, 4
          %s232 = scalar_lea.hbm %s3, %s231
          %s233 = sshll.u32 %s232, 4
          %s234 = int_to_ptr.hbm [resolvable:$true] %s233
          %s235 = sshll.u32 %s225, 4
          %s236 = int_to_ptr.vmem [resolvable:$true] %s235
          %241 = dma.hbm_to_vmem [thread:$0]  %s234, 2048, %s236, %s222, 512, 512, 32
        $region32: #{tpu_custom_call.1} parent=15 // pred_fallthru
          _
      $region16: #{tpu_custom_call.1} parent=5 // pred_fallthru
        _
      %p242 = scmp.le.s32.totalorder 1, %s16
      %p243 = scmp.lt.s32.totalorder %s16, 3
      %p244 = pnand %p242, %p243
      %p245 = pneg %p244
      // Predicated region
      $region33: #{tpu_custom_call.1} parent=5 // pred_check
        _
      $region34: #{tpu_custom_call.1} parent=5 // pred_check_branch
        %247 = sbr.rel (%p244) target = $region36
      $region35: #{tpu_custom_call.1} parent=5 // pred_region
        %s248 = ssub.s32 %s16, 1
        %s249 = sand.u32 %s127, 1
        %s250 = scalar_lea.sflag [#allocation6], %s249
        %s251 = sand.u32 %s127, 1
        %s252 = smul.addr %s251, 128
        %s253 = scalar_lea.vmem [#allocation5], %s252
        // Predicated region
        $region37: #{tpu_custom_call.1} parent=35 // pred_check
          %p254 = pneg %p140
        $region38: #{tpu_custom_call.1} parent=35 // pred_check_branch
          %256 = sbr.rel (%p254) target = $region40
        $region39: #{tpu_custom_call.1} parent=35 // pred_region
          %258 = dma.done %s250, 2048
        $region40: #{tpu_custom_call.1} parent=35 // pred_fallthru
          _
        %s259 = sadd.s32 %s25, %s26
        %s260 = smul.u32 4, %s259
        %p261 = scmp.lt.s32.totalorder %s260, 7
        %s262 = scalar_select %p261, %s260, 7
        %s263 = smul.addr %s262, 8
        %s264 = scalar_lea.vmem %s0, %s263
        %p265 = pneg %p56
        %p266 = pneg %p53
        %s267 = sadd.s32 %s25, %s26
        %s268 = smul.u32 4, %s267
        %p269 = scmp.lt.s32.totalorder %s268, 7
        %s270 = scalar_select %p269, %s268, 7
        %s271 = smul.addr %s270, 8
        %s272 = scalar_lea.vmem %s1, %s271
        %p273 = pneg %p84
        %p274 = pneg %p81
        %s275 = sadd.s32 %s25, %s26
        %s276 = smul.u32 4, %s275
        %p277 = scmp.lt.s32.totalorder %s276, 7
        %s278 = scalar_select %p277, %s276, 7
        %s279 = smul.addr %s278, 4
        %s280 = scalar_lea.vmem %s2, %s279
        %p281 = pneg %p112
        %p282 = pneg %p109
        %s283 = sand.u32 %s127, 1
        %s284 = scalar_lea.sflag [#allocation6], %s283
        %s285 = sand.u32 %s127, 1
        %s286 = smul.addr %s285, 128
        %s287 = scalar_lea.vmem [#allocation5], %s286
        %p288 = pneg %p140
        %p289 = pneg %p137
        %p290 = pneg %p166
        %p291 = pneg %p163
        %s292 = sand.u32 %s153, 1
        %s293 = scalar_lea.sflag [#allocation7], %s292
        %s294 = sand.u32 %s153, 1
        %s295 = smul.addr %s294, 8
        %s296 = scalar_lea.vmem [#allocation8], %s295
        %s297 = sadd.s32 %s25, %s26
        %s298 = smul.u32 4, %s297
        %p299 = scmp.lt.s32.totalorder %s298, 7
        %s300 = scalar_select %p299, %s298, 7
        %s301 = smul.addr %s300, 8
        %s302 = scalar_lea.vmem %s0, %s301
        %s303 = sadd.s32 %s25, %s26
        %s304 = smul.u32 4, %s303
        %s305 = sadd.s32 %s25, %s26
        %s306 = smul.u32 4, %s305
        %p307 = scmp.lt.s32.totalorder %s306, 7
        %s308 = scalar_select %p307, %s306, 7
        %s309 = smul.addr %s308, 8
        %s310 = scalar_lea.vmem %s1, %s309
        %s311 = sadd.s32 %s25, %s26
        %s312 = smul.u32 4, %s311
        %s313 = sadd.s32 %s25, %s26
        %s314 = smul.u32 4, %s313
        %p315 = scmp.lt.s32.totalorder %s314, 7
        %s316 = scalar_select %p315, %s314, 7
        %s317 = smul.addr %s316, 4
        %s318 = scalar_lea.vmem %s2, %s317
        %s319 = sadd.s32 %s25, %s26
        %s320 = smul.u32 4, %s319
        %s321 = sadd.s32 %s25, %s26
        %s322 = smul.u32 4, %s321
        %p323 = scmp.eq.s32.totalorder %s26, 0
        // Predicated region
        $region41: #{tpu_custom_call.1} parent=35 // pred_check
          %p324 = pneg %p323
        $region42: #{tpu_custom_call.1} parent=35 // pred_check_branch
          %326 = sbr.rel (%p324) target = $region44
        $region43: #{tpu_custom_call.1} parent=35 // pred_region
          %vm327 = vcmask 7168
          %328 = vst.msk [vmem:[#allocation2] sm:$0xff] %vm327, 0.0
          %329 = vst.msk [vmem:[#allocation2 + $0x8] sm:$0xff] %vm327, 0.0
          %330 = vst.msk [vmem:[#allocation2 + $0x10] sm:$0xff] %vm327, 0.0
          %331 = vst.msk [vmem:[#allocation2 + $0x18] sm:$0xff] %vm327, 0.0
          %vm332 = vcmask 253952
          %333 = vst.msk [vmem:[#allocation3] sm:$0x1] %vm332, 0.0
          %334 = vst [vmem:[#allocation4] sm:$0xff] 0.0
        $region44: #{tpu_custom_call.1} parent=35 // pred_fallthru
          _
        %v335 = vld [vmem:[%s302] sm:$0xff]
        %v336 = vld [vmem:[%s302 + $0x8] sm:$0xff]
        %v337 = vld [vmem:[%s302 + $0x10] sm:$0xff]
        %v338 = vld [vmem:[%s302 + $0x18] sm:$0xff]
        %vm339 = vcmask 80896
        %v340 = vsel %vm339, %v335, -inf
        %341 = vmax.xlane.f32.xlu0 %v340
        %v342 = vpop.xlane.xlu0 %341
        %v343 = vsel %vm339, %v336, -inf
        %344 = vmax.xlane.f32.xlu0 %v343
        %v345 = vpop.xlane.xlu0 %344
        %v346 = vsel %vm339, %v337, -inf
        %347 = vmax.xlane.f32.xlu0 %v346
        %v348 = vpop.xlane.xlu0 %347
        %v349 = vsel %vm339, %v338, -inf
        %350 = vmax.xlane.f32.xlu0 %v349
        %v351 = vpop.xlane.xlu0 %350
        %v352 = vsub.f32 %v335, %v342
        %v353 = vsub.f32 %v336, %v345
        %v354 = vsub.f32 %v337, %v348
        %v355 = vsub.f32 %v338, %v351
        %v356 = vmul.f32 %v352, 1.442695
        %v357 = vpow.pop %v356
        %v358 = vmul.f32 %v353, 1.442695
        %v359 = vpow.pop %v358
        %v360 = vmul.f32 %v354, 1.442695
        %v361 = vpow.pop %v360
        %v362 = vmul.f32 %v355, 1.442695
        %v363 = vpow.pop %v362
        %v364 = vsel %vm339, %v357, 0.0
        %365 = vadd.xlane.f32.xlu0 %v364
        %v366 = vpop.xlane.xlu0 %365
        %v367 = vsel %vm339, %v359, 0.0
        %368 = vadd.xlane.f32.xlu0 %v367
        %v369 = vpop.xlane.xlu0 %368
        %v370 = vsel %vm339, %v361, 0.0
        %371 = vadd.xlane.f32.xlu0 %v370
        %v372 = vpop.xlane.xlu0 %371
        %v373 = vsel %vm339, %v363, 0.0
        %374 = vadd.xlane.f32.xlu0 %v373
        %v375 = vpop.xlane.xlu0 %374
        %v376 = vlog2.pop %v366
        %v377 = vmul.f32 %v376, 0.6931472
        %v378 = vlog2.pop %v369
        %v379 = vmul.f32 %v378, 0.6931472
        %v380 = vlog2.pop %v372
        %v381 = vmul.f32 %v380, 0.6931472
        %v382 = vlog2.pop %v375
        %v383 = vmul.f32 %v382, 0.6931472
        %v384 = vadd.f32 %v342, %v377
        %v385 = vadd.f32 %v345, %v379
        %v386 = vadd.f32 %v348, %v381
        %v387 = vadd.f32 %v351, %v383
        %v388 = vlaneseq
        %v389 = vand.u32 %v388, 127
        %v390 = vld [vmem:[%s310] sm:$0xff]
        %v391 = vld [vmem:[%s310 + $0x8] sm:$0xff]
        %v392 = vld [vmem:[%s310 + $0x10] sm:$0xff]
        %v393 = vld [vmem:[%s310 + $0x18] sm:$0xff]
        %394 = vset.pattern.permute.xlu0 0
        %395 = vperm.xlu0 %394, %v390
        %v396 = vpop.permute.xlu0 %395
        %397 = vset.pattern.permute.xlu0 0
        %398 = vperm.xlu0 %397, %v391
        %v399 = vpop.permute.xlu0 %398
        %400 = vset.pattern.permute.xlu0 0
        %401 = vperm.xlu0 %400, %v392
        %v402 = vpop.permute.xlu0 %401
        %403 = vset.pattern.permute.xlu0 0
        %404 = vperm.xlu0 %403, %v393
        %v405 = vpop.permute.xlu0 %404
        %vm406 = vcmp.eq.s32.totalorder %v389, %v396
        %vm407 = vcmp.eq.s32.totalorder %v389, %v399
        %vm408 = vcmp.eq.s32.totalorder %v389, %v402
        %vm409 = vcmp.eq.s32.totalorder %v389, %v405
        %v410 = vsel %vm406, %v335, 0.0
        %v411 = vsel %vm407, %v336, 0.0
        %v412 = vsel %vm408, %v337, 0.0
        %v413 = vsel %vm409, %v338, 0.0
        %v414 = vsel %vm339, %v410, 0.0
        %415 = vadd.xlane.f32.xlu0 %v414
        %v416 = vpop.xlane.xlu0 %415
        %v417 = vsel %vm339, %v411, 0.0
        %418 = vadd.xlane.f32.xlu0 %v417
        %v419 = vpop.xlane.xlu0 %418
        %v420 = vsel %vm339, %v412, 0.0
        %421 = vadd.xlane.f32.xlu0 %v420
        %v422 = vpop.xlane.xlu0 %421
        %v423 = vsel %vm339, %v413, 0.0
        %424 = vadd.xlane.f32.xlu0 %v423
        %v425 = vpop.xlane.xlu0 %424
        %v426 = vld [vmem:[#allocation2] sm:$0xff]
        %v427 = vld [vmem:[#allocation2 + $0x8] sm:$0xff]
        %v428 = vld [vmem:[#allocation2 + $0x10] sm:$0xff]
        %v429 = vld [vmem:[#allocation2 + $0x18] sm:$0xff]
        %v430 = vsub.f32 %v384, %v416
        %v431 = vsub.f32 %v385, %v419
        %v432 = vsub.f32 %v386, %v422
        %v433 = vsub.f32 %v387, %v425
        %v434 = vadd.f32 %v426, %v430
        %v435 = vadd.f32 %v427, %v431
        %v436 = vadd.f32 %v428, %v432
        %v437 = vadd.f32 %v429, %v433
        %vm438 = vcmask 7168
        %439 = vst.msk [vmem:[#allocation2] sm:$0xff] %vm438, %v434
        %440 = vst.msk [vmem:[#allocation2 + $0x8] sm:$0xff] %vm438, %v435
        %441 = vst.msk [vmem:[#allocation2 + $0x10] sm:$0xff] %vm438, %v436
        %442 = vst.msk [vmem:[#allocation2 + $0x18] sm:$0xff] %vm438, %v437
        %v443 = vld [vmem:[#allocation3] sm:$0x1]
        %v444 = vld [vmem:[%s318] sm:$0xf]
        %v445 = vld [vmem:[%s318 + $0x4] sm:$0xf]
        %v446 = vld [vmem:[%s318 + $0x8] sm:$0xf]
        %v447 = vld [vmem:[%s318 + $0xc] sm:$0xf]
        %v448 = vunpack.c.l.bf16 %v444
        %v449 = vunpack.c.l.bf16 %v445
        %v450 = vunpack.c.l.bf16 %v446
        %v451 = vunpack.c.l.bf16 %v447
        %vm452 = vcmask 261120
        %v453 = vsel %vm452, %v448, 0.0
        %v454 = vsel %vm452, %v449, 0.0
        %v455 = vadd.f32 %v453, %v454
        %v456 = vsel %vm452, %v450, 0.0
        %v457 = vadd.f32 %v455, %v456
        %v458 = vsel %vm452, %v451, 0.0
        %v459 = vadd.f32 %v457, %v458
        %v460 = vrot.slane %v459, 4
        %v461 = vadd.f32 %v459, %v460
        %v462 = vrot.slane %v461, 2
        %v463 = vadd.f32 %v461, %v462
        %v464 = vrot.slane %v463, 1
        %v465 = vadd.f32 %v463, %v464
        %v466 = vadd.f32 %v443, %v465
        %vm467 = vcmask 253952
        %468 = vst.msk [vmem:[#allocation3] sm:$0x1] %vm467, %v466
        %v469 = vld [vmem:[#allocation4] sm:$0xff]
        %v470 = vld [vmem:[%s253] sm:$0xff]
        %v471 = vld [vmem:[%s253 + $0x8] sm:$0xff]
        %v472 = vld [vmem:[%s253 + $0x10] sm:$0xff]
        %v473 = vld [vmem:[%s253 + $0x18] sm:$0xff]
        %v474 = vld [vmem:[%s253 + $0x20] sm:$0xff]
        %v475 = vld [vmem:[%s253 + $0x28] sm:$0xff]
        %v476 = vld [vmem:[%s253 + $0x30] sm:$0xff]
        %v477 = vld [vmem:[%s253 + $0x38] sm:$0xff]
        %v478 = vld [vmem:[%s253 + $0x40] sm:$0xff]
        %v479 = vld [vmem:[%s253 + $0x48] sm:$0xff]
        %v480 = vld [vmem:[%s253 + $0x50] sm:$0xff]
        %v481 = vld [vmem:[%s253 + $0x58] sm:$0xff]
        %v482 = vld [vmem:[%s253 + $0x60] sm:$0xff]
        %v483 = vld [vmem:[%s253 + $0x68] sm:$0xff]
        %v484 = vld [vmem:[%s253 + $0x70] sm:$0xff]
        %v485 = vld [vmem:[%s253 + $0x78] sm:$0xff]
        %v486 = vunpack.c.l.bf16 %v470
        %v487 = vunpack.c.h.bf16 %v470
        %v488 = vunpack.c.l.bf16 %v471
        %v489 = vunpack.c.h.bf16 %v471
        %v490 = vunpack.c.l.bf16 %v472
        %v491 = vunpack.c.h.bf16 %v472
        %v492 = vunpack.c.l.bf16 %v473
        %v493 = vunpack.c.h.bf16 %v473
        %v494 = vunpack.c.l.bf16 %v474
        %v495 = vunpack.c.h.bf16 %v474
        %v496 = vunpack.c.l.bf16 %v475
        %v497 = vunpack.c.h.bf16 %v475
        %v498 = vunpack.c.l.bf16 %v476
        %v499 = vunpack.c.h.bf16 %v476
        %v500 = vunpack.c.l.bf16 %v477
        %v501 = vunpack.c.h.bf16 %v477
        %v502 = vunpack.c.l.bf16 %v478
        %v503 = vunpack.c.h.bf16 %v478
        %v504 = vunpack.c.l.bf16 %v479
        %v505 = vunpack.c.h.bf16 %v479
        %v506 = vunpack.c.l.bf16 %v480
        %v507 = vunpack.c.h.bf16 %v480
        %v508 = vunpack.c.l.bf16 %v481
        %v509 = vunpack.c.h.bf16 %v481
        %v510 = vunpack.c.l.bf16 %v482
        %v511 = vunpack.c.h.bf16 %v482
        %v512 = vunpack.c.l.bf16 %v483
        %v513 = vunpack.c.h.bf16 %v483
        %v514 = vunpack.c.l.bf16 %v484
        %v515 = vunpack.c.h.bf16 %v484
        %v516 = vunpack.c.l.bf16 %v485
        %v517 = vunpack.c.h.bf16 %v485
        %v518 = vadd.f32 %v486, %v494
        %v519 = vadd.f32 %v518, %v502
        %v520 = vadd.f32 %v519, %v510
        %v521 = vrot.slane %v520, 4
        %v522 = vadd.f32 %v520, %v521
        %v523 = vrot.slane %v522, 2
        %v524 = vadd.f32 %v522, %v523
        %v525 = vrot.slane %v524, 1
        %v526 = vadd.f32 %v524, %v525
        %v527 = vadd.f32 %v487, %v495
        %v528 = vadd.f32 %v527, %v503
        %v529 = vadd.f32 %v528, %v511
        %v530 = vrot.slane %v529, 4
        %v531 = vadd.f32 %v529, %v530
        %v532 = vrot.slane %v531, 2
        %v533 = vadd.f32 %v531, %v532
        %v534 = vrot.slane %v533, 1
        %v535 = vadd.f32 %v533, %v534
        %v536 = vadd.f32 %v488, %v496
        %v537 = vadd.f32 %v536, %v504
        %v538 = vadd.f32 %v537, %v512
        %v539 = vrot.slane %v538, 4
        %v540 = vadd.f32 %v538, %v539
        %v541 = vrot.slane %v540, 2
        %v542 = vadd.f32 %v540, %v541
        %v543 = vrot.slane %v542, 1
        %v544 = vadd.f32 %v542, %v543
        %v545 = vadd.f32 %v489, %v497
        %v546 = vadd.f32 %v545, %v505
        %v547 = vadd.f32 %v546, %v513
        %v548 = vrot.slane %v547, 4
        %v549 = vadd.f32 %v547, %v548
        %v550 = vrot.slane %v549, 2
        %v551 = vadd.f32 %v549, %v550
        %v552 = vrot.slane %v551, 1
        %v553 = vadd.f32 %v551, %v552
        %v554 = vadd.f32 %v490, %v498
        %v555 = vadd.f32 %v554, %v506
        %v556 = vadd.f32 %v555, %v514
        %v557 = vrot.slane %v556, 4
        %v558 = vadd.f32 %v556, %v557
        %v559 = vrot.slane %v558, 2
        %v560 = vadd.f32 %v558, %v559
        %v561 = vrot.slane %v560, 1
        %v562 = vadd.f32 %v560, %v561
        %v563 = vadd.f32 %v491, %v499
        %v564 = vadd.f32 %v563, %v507
        %v565 = vadd.f32 %v564, %v515
        %v566 = vrot.slane %v565, 4
        %v567 = vadd.f32 %v565, %v566
        %v568 = vrot.slane %v567, 2
        %v569 = vadd.f32 %v567, %v568
        %v570 = vrot.slane %v569, 1
        %v571 = vadd.f32 %v569, %v570
        %v572 = vadd.f32 %v492, %v500
        %v573 = vadd.f32 %v572, %v508
        %v574 = vadd.f32 %v573, %v516
        %v575 = vrot.slane %v574, 4
        %v576 = vadd.f32 %v574, %v575
        %v577 = vrot.slane %v576, 2
        %v578 = vadd.f32 %v576, %v577
        %v579 = vrot.slane %v578, 1
        %v580 = vadd.f32 %v578, %v579
        %v581 = vadd.f32 %v493, %v501
        %v582 = vadd.f32 %v581, %v509
        %v583 = vadd.f32 %v582, %v517
        %v584 = vrot.slane %v583, 4
        %v585 = vadd.f32 %v583, %v584
        %v586 = vrot.slane %v585, 2
        %v587 = vadd.f32 %v585, %v586
        %v588 = vrot.slane %v587, 1
        %v589 = vadd.f32 %v587, %v588
        %v598 = vrot.slane %v535, 7
        %v599 = vrot.slane %v544, 6
        %v600 = vrot.slane %v553, 5
        %v601 = vrot.slane %v562, 4
        %v602 = vrot.slane %v571, 3
        %v603 = vrot.slane %v580, 2
        %v604 = vrot.slane %v589, 1
        %vm605 = vcmask 1040384
        %v606 = vsel %vm605, %v526, %v598
        %vm607 = vcmask 1042434
        %v608 = vsel %vm607, %v599, %v600
        %vm609 = vcmask 1041408
        %v610 = vsel %vm609, %v606, %v608
        %vm611 = vcmask 1044484
        %v612 = vsel %vm611, %v601, %v602
        %vm613 = vcmask 1046534
        %v614 = vsel %vm613, %v603, %v604
        %vm615 = vcmask 1045508
        %v616 = vsel %vm615, %v612, %v614
        %vm617 = vcmask 1043456
        %v618 = vsel %vm617, %v610, %v616
        %v620 = vadd.f32 %v469, %v618
        %621 = vst [vmem:[#allocation4] sm:$0xff] %v620
        // Predicated region
        $region45: #{tpu_custom_call.1} parent=35 // pred_check
          %p622 = pneg %p323
        $region46: #{tpu_custom_call.1} parent=35 // pred_check_branch
          %624 = sbr.rel (%p622) target = $region48
        $region47: #{tpu_custom_call.1} parent=35 // pred_region
          %v625 = vld [vmem:[#allocation2] sm:$0xff]
          %v626 = vld [vmem:[#allocation2 + $0x8] sm:$0xff]
          %v627 = vld [vmem:[#allocation2 + $0x10] sm:$0xff]
          %v628 = vld [vmem:[#allocation2 + $0x18] sm:$0xff]
          %v629 = vsel %vm438, %v625, 0.0
          %v630 = vsel %vm438, %v626, 0.0
          %v631 = vadd.f32 %v629, %v630
          %v632 = vsel %vm438, %v627, 0.0
          %v633 = vadd.f32 %v631, %v632
          %v634 = vsel %vm438, %v628, 0.0
          %v635 = vadd.f32 %v633, %v634
          %636 = vadd.xlane.f32.xlu0 %v635
          %v637 = vpop.xlane.xlu0 %636
          %v638 = vrot.slane %v637, 4
          %v639 = vadd.f32 %v637, %v638
          %v640 = vrot.slane %v639, 2
          %v641 = vadd.f32 %v639, %v640
          %v642 = vrot.slane %v641, 1
          %v643 = vadd.f32 %v641, %v642
          %s644 = vtos %v643
          %v645 = vld [vmem:[#allocation3] sm:$0x1]
          %v646 = vsel %vm467, %v645, 0.0
          %647 = vadd.xlane.f32.xlu0 %v646
          %v648 = vpop.xlane.xlu0 %647
          %v649 = vrot.slane %v648, 4
          %v650 = vadd.f32 %v648, %v649
          %v651 = vrot.slane %v650, 2
          %v652 = vadd.f32 %v650, %v651
          %v653 = vrot.slane %v652, 1
          %v654 = vadd.f32 %v652, %v653
          %s655 = vtos %v654
          %v656 = vld [vmem:[#allocation4] sm:$0xff]
          %v658 = vperm.slane %v656, 0
          %v659 = vperm.slane %v656, 1
          %v660 = vperm.slane %v656, 2
          %v661 = vperm.slane %v656, 3
          %v662 = vperm.slane %v656, 4
          %v663 = vperm.slane %v656, 5
          %v664 = vperm.slane %v656, 6
          %v665 = vperm.slane %v656, 7
          %v674 = vsel %vm605, %v658, 0.0
          %v675 = vsel %vm605, %v659, 0.0
          %v676 = vadd.f32 %v674, %v675
          %v677 = vsel %vm605, %v660, 0.0
          %v678 = vadd.f32 %v676, %v677
          %v679 = vsel %vm605, %v661, 0.0
          %v680 = vadd.f32 %v678, %v679
          %v681 = vsel %vm605, %v662, 0.0
          %v682 = vadd.f32 %v680, %v681
          %v683 = vsel %vm605, %v663, 0.0
          %v684 = vadd.f32 %v682, %v683
          %v685 = vsel %vm605, %v664, 0.0
          %v686 = vadd.f32 %v684, %v685
          %v687 = vsel %vm605, %v665, 0.0
          %v688 = vadd.f32 %v686, %v687
          %689 = vadd.xlane.f32.xlu0 %v688
          %v690 = vpop.xlane.xlu0 %689
          %v691 = vrot.slane %v690, 4
          %v692 = vadd.f32 %v690, %v691
          %v693 = vrot.slane %v692, 2
          %v694 = vadd.f32 %v692, %v693
          %v695 = vrot.slane %v694, 1
          %v696 = vadd.f32 %v694, %v695
          %s697 = vtos %v696
          %vm698 = vcmp.eq.s32.totalorder %v389, 0
          %vm699 = vcmp.eq.s32.totalorder %v389, 1
          %vm700 = vcmp.eq.s32.totalorder %v389, 2
          %v701 = vstv %s697
          %v702 = vsel %vm700, %v701, 0.0
          %v703 = vstv %s655
          %v704 = vsel %vm699, %v703, %v702
          %v705 = vstv %s644
          %v706 = vsel %vm698, %v705, %v704
          %707 = vst [vmem:[%s296] sm:$0xff] %v706
        $region48: #{tpu_custom_call.1} parent=35 // pred_fallthru
          _
        %s708 = sand.u32 %s153, 1
        %s709 = scalar_lea.sflag [#allocation7], %s708
        %s710 = sand.u32 %s153, 1
        %s711 = smul.addr %s710, 8
        %s712 = scalar_lea.vmem [#allocation8], %s711
        // Predicated region
        $region49: #{tpu_custom_call.1} parent=35 // pred_check
          %p713 = pneg %p163
        $region50: #{tpu_custom_call.1} parent=35 // pred_check_branch
          %715 = sbr.rel (%p713) target = $region52
        $region51: #{tpu_custom_call.1} parent=35 // pred_region
          %717 = vsyncadd %s709, 0
          %s718 = smul.addr %s25, 8
          %s719 = scalar_lea.hbm %s4, %s718
          %s721 = sshll.u32 %s712, 4
          %s722 = int_to_ptr.vmem [resolvable:$true] %s721
          %s723 = sshll.u32 %s719, 4
          %s724 = int_to_ptr.hbm [resolvable:$true] %s723
          %726 = dma.vmem_to_hbm [thread:$0]  %s722, 128, %s724, %s709
        $region52: #{tpu_custom_call.1} parent=35 // pred_fallthru
          _
      $region36: #{tpu_custom_call.1} parent=5 // pred_fallthru
        _
      %p727 = scmp.le.s32.totalorder 2, %s16
      // Predicated region
      $region53: #{tpu_custom_call.1} parent=5 // pred_check
        %p728 = pneg %p727
      $region54: #{tpu_custom_call.1} parent=5 // pred_check_branch
        %730 = sbr.rel (%p728) target = $region56
      $region55: #{tpu_custom_call.1} parent=5 // pred_region
        %s731 = ssub.s32 %s16, 2
        // Predicated region
        $region57: #{tpu_custom_call.1} parent=55 // pred_check
          %p732 = pneg %p169
        $region58: #{tpu_custom_call.1} parent=55 // pred_check_branch
          %734 = sbr.rel (%p732) target = $region60
        $region59: #{tpu_custom_call.1} parent=55 // pred_region
          %s735 = sand.u32 %s154, 1
          %s736 = scalar_lea.sflag [#allocation7], %s735
          %s737 = sand.u32 %s154, 1
          %s738 = smul.addr %s737, 8
          %s739 = scalar_lea.vmem [#allocation8], %s738
          %741 = dma.done %s736, 128
        $region60: #{tpu_custom_call.1} parent=55 // pred_fallthru
          _
      $region56: #{tpu_custom_call.1} parent=5 // pred_fallthru
        _
    $region6: #{tpu_custom_call.1} parent=1 // loop_footer
      %s20 = sadd.s32 1, %s16
    $region7: #{tpu_custom_call.1} parent=1 // loop_footer_branch
      %15 = sbr.rel target = $region3
    $region8: #{tpu_custom_call.1} parent=1 // loop_exit
      _
    %742 = vsyncpa [#allocation6], 1
    %s743 = scalar_lea.sflag [#allocation6], 1
    %744 = vsyncpa %s743, 1
    %745 = vsyncpa [#allocation7], 1
    %s746 = scalar_lea.sflag [#allocation7], 1
    %747 = vsyncpa %s746, 1

</llo_original>
